<compile_context>
chip_gen: v7x
topology: tpu7x:2x2x1
jax: 0.10.0
libtpu: 0.0.40
codegen_flags: <defaults>
</compile_context>

<pallas_src>
import functools

import jax
import jax.numpy as jnp
from jax import lax
from jax.experimental import pallas as pl
from jax.experimental.pallas import tpu as pltpu


# --------------------------------------------------------------------------- #
# Kernel helpers
# --------------------------------------------------------------------------- #
def _row_validity_mask(tm, n_total):
    """(TM, 1) f32 mask of rows that belong to the un-padded batch."""
    row0 = pl.program_id(0) * tm
    row_ids = row0 + lax.broadcasted_iota(jnp.int32, (tm, 1), 0)
    return (row_ids < n_total).astype(jnp.float32)


def _ce_partial_sum(logits_ref, targets_ref, mask):
    """Partial sum over this batch tile of (logsumexp(row) - logit[target])."""
    logits = logits_ref[...].astype(jnp.float32)                 # (TM, C)
    tm, c = logits.shape

    # numerically stable per-row log-sum-exp
    row_max = jnp.max(logits, axis=-1, keepdims=True)            # (TM, 1)
    lse = row_max + jnp.log(
        jnp.sum(jnp.exp(logits - row_max), axis=-1, keepdims=True))

    # gather logit at the target class via one-hot (lane iota == target)
    col_ids = lax.broadcasted_iota(jnp.int32, (tm, c), 1)        # (TM, C)
    onehot = (col_ids == targets_ref[...]).astype(jnp.float32)
    tgt_logit = jnp.sum(logits * onehot, axis=-1, keepdims=True)  # (TM, 1)

    return jnp.sum((lse - tgt_logit) * mask)                     # scalar


def _write_partials(out_ref, ce_partial, kl_partial):
    """Lane-dense write of the two per-tile scalars into a (1, 8, 128) block.

    ce goes to [0, 0, 0], kl to [0, 1, 0]; everything else is zero.
    """
    sub = lax.broadcasted_iota(jnp.int32, out_ref.shape, 1)      # sublane id
    out_ref[...] = jnp.where(sub == 0, ce_partial,
                             jnp.where(sub == 1, kl_partial, 0.0))


# --------------------------------------------------------------------------- #
# Kernels
# --------------------------------------------------------------------------- #
def _ce_kl_kernel(logits_ref, targets_ref, p_ref, q_ref, out_ref,
                  *, n_total, tm):
    mask = _row_validity_mask(tm, n_total)
    ce_partial = _ce_partial_sum(logits_ref, targets_ref, mask)

    # KL (xlogy semantics, single log):  q * log(q / p),  0 where q == 0.
    # Padded rows carry q == 0 (and p == 1), so they contribute exactly 0.
    p = p_ref[...].astype(jnp.float32)                           # tau3_lamb
    q = q_ref[...].astype(jnp.float32)                           # tau4_lamb
    q_pos = q > 0.0
    safe_q = jnp.where(q_pos, q, 1.0)
    kl_term = safe_q * jnp.log(safe_q / p)
    kl_partial = jnp.sum(jnp.where(q_pos, kl_term, 0.0))

    _write_partials(out_ref, ce_partial, kl_partial)


def _ce_kernel(logits_ref, targets_ref, out_ref, *, n_total, tm):
    mask = _row_validity_mask(tm, n_total)
    ce_partial = _ce_partial_sum(logits_ref, targets_ref, mask)
    _write_partials(out_ref, ce_partial, jnp.float32(0.0))


# --------------------------------------------------------------------------- #
# Wrapper
# --------------------------------------------------------------------------- #
def _choose_tile_rows(n, row_bytes, budget_bytes=8 * 1024 * 1024):
    """Largest multiple-of-8 row tile whose double-buffered input footprint
    (~2 * TM * row_bytes) stays under a conservative VMEM budget that is safe
    on v7x (64 MiB physical / 32 MiB default scoped). v6e callers may pass a
    larger tile_rows explicitly to use the extra VMEM."""
    tm = budget_bytes // max(1, 2 * row_bytes)
    tm = max(8, min(1024, (tm // 8) * 8))
    n_pad8 = -(-n // 8) * 8
    return min(tm, n_pad8)


def _pad_rows(x, n_pad, value=0.0):
    n = x.shape[0]
    if n_pad == n:
        return x
    pad = [(0, n_pad - n)] + [(0, 0)] * (x.ndim - 1)
    return jnp.pad(x, pad, constant_values=value)


def marginal_penalty_loss(output, targets, attn, kl_weight=1e-4,
                          attn_kl=True, detach_targets=False, tile_rows=None):
    """JAX/Pallas equivalent of MarginalPenaltyLoss.forward."""
    n, c = output.shape
    targets_col = targets.astype(jnp.int32).reshape(n, 1)

    if attn_kl and attn is not None:
        if len(attn) != 4:
            raise NotImplementedError
        tau3_lamb, tau4_lamb, _, _ = attn
        if detach_targets:
            tau4_lamb = lax.stop_gradient(tau4_lamb)
        l = tau3_lamb.shape[-1]

        row_bytes = (c * output.dtype.itemsize
                     + 2 * l * tau3_lamb.dtype.itemsize + 4)
        tm = tile_rows if tile_rows is not None else _choose_tile_rows(n, row_bytes)
        n_pad = -(-n // tm) * tm
        num_tiles = n_pad // tm

        logits_p = _pad_rows(output, n_pad)
        targets_p = _pad_rows(targets_col, n_pad)
        p_p = _pad_rows(tau3_lamb, n_pad, value=1.0)   # padded rows: q=0 -> KL 0
        q_p = _pad_rows(tau4_lamb, n_pad, value=0.0)

        parts = pl.pallas_call(
            functools.partial(_ce_kl_kernel, n_total=n, tm=tm),
            out_shape=jax.ShapeDtypeStruct((num_tiles, 8, 128), jnp.float32),
            grid=(num_tiles,),
            in_specs=[
                pl.BlockSpec((tm, c), lambda i: (i, 0)),   # logits
                pl.BlockSpec((tm, 1), lambda i: (i, 0)),   # targets (int32)
                pl.BlockSpec((tm, l), lambda i: (i, 0)),   # tau3_lamb (p)
                pl.BlockSpec((tm, l), lambda i: (i, 0)),   # tau4_lamb (q)
            ],
            out_specs=pl.BlockSpec((1, 8, 128), lambda i: (i, 0, 0)),
            compiler_params=pltpu.CompilerParams(
                dimension_semantics=("parallel",)),
            cost_estimate=pl.CostEstimate(
                flops=n_pad * (5 * c + 6 * l),
                transcendentals=n_pad * (c + 1 + l),
                bytes_accessed=n_pad * row_bytes + num_tiles * 8 * 128 * 4),
        )(logits_p, targets_p, p_p, q_p)

        ce = jnp.sum(parts[:, 0, 0]) / jnp.float32(n)
        kl = jnp.sum(parts[:, 1, 0]) / jnp.float32(n)
        total = ce + jnp.float32(kl_weight) * kl
        return (ce, kl, total)

    # ---- attn_kl disabled / no attn: cross-entropy only (no dummy KL work) --
    row_bytes = c * output.dtype.itemsize + 4
    tm = tile_rows if tile_rows is not None else _choose_tile_rows(n, row_bytes)
    n_pad = -(-n // tm) * tm
    num_tiles = n_pad // tm

    logits_p = _pad_rows(output, n_pad)
    targets_p = _pad_rows(targets_col, n_pad)

    parts = pl.pallas_call(
        functools.partial(_ce_kernel, n_total=n, tm=tm),
        out_shape=jax.ShapeDtypeStruct((num_tiles, 8, 128), jnp.float32),
        grid=(num_tiles,),
        in_specs=[
            pl.BlockSpec((tm, c), lambda i: (i, 0)),
            pl.BlockSpec((tm, 1), lambda i: (i, 0)),
        ],
        out_specs=pl.BlockSpec((1, 8, 128), lambda i: (i, 0, 0)),
        compiler_params=pltpu.CompilerParams(
            dimension_semantics=("parallel",)),
        cost_estimate=pl.CostEstimate(
            flops=n_pad * 5 * c,
            transcendentals=n_pad * (c + 1),
            bytes_accessed=n_pad * row_bytes + num_tiles * 8 * 128 * 4),
    )(logits_p, targets_p)

    ce = jnp.sum(parts[:, 0, 0]) / jnp.float32(n)
    return (ce,)


# --------------------------------------------------------------------------- #
# Pure-JAX reference + self-test
# --------------------------------------------------------------------------- #
def _reference(output, targets, tau3_lamb, tau4_lamb, kl_weight=1e-4):
    logits = output.astype(jnp.float32)
    lse = jax.scipy.special.logsumexp(logits, axis=-1)
    tgt = jnp.take_along_axis(logits, targets[:, None], axis=-1)[:, 0]
    ce = jnp.mean(lse - tgt)
    kl = jnp.sum(tau4_lamb * (jnp.log(tau4_lamb) - jnp.log(tau3_lamb))
                 ) / tau3_lamb.shape[0]
    return ce, kl, ce + kl_weight * kl


if __name__ == "__main__":
    key = jax.random.PRNGKey(0)
    k1, k2, k3, k4 = jax.random.split(key, 4)

    # small shapes; N not a multiple of the tile to exercise padding/masking
    N, C, L = 30, 16, 32

    output = jax.random.normal(k1, (N, C), dtype=jnp.float32)       # logits
    targets = jax.random.randint(k2, (N,), 0, C, dtype=jnp.int32)   # class ids
    tau3_lamb = jax.nn.softmax(jax.random.normal(k3, (N, L), jnp.float32), axis=-1)
    tau4_lamb = jax.nn.softmax(jax.random.normal(k4, (N, L), jnp.float32), axis=-1)
    attn = (tau3_lamb, tau4_lamb, tau3_lamb, tau4_lamb)

    # tile_rows=8 -> 4 grid steps (exercises the batch grid + partial sums)
    ce, kl, total = marginal_penalty_loss(output, targets, attn,
                                          kl_weight=1e-4, tile_rows=8)
    jax.block_until_ready(total)

    ce_ref, kl_ref, total_ref = _reference(output, targets, tau3_lamb, tau4_lamb)
    assert jnp.allclose(ce, ce_ref, atol=1e-5, rtol=1e-5), (ce, ce_ref)
    assert jnp.allclose(kl, kl_ref, atol=1e-5, rtol=1e-5), (kl, kl_ref)
    assert jnp.allclose(total, total_ref, atol=1e-5, rtol=1e-5), (total, total_ref)

    # auto tile choice path (single tile, no padding copies needed after pad-to-8)
    ce2, kl2, total2 = marginal_penalty_loss(output, targets, attn, kl_weight=1e-4)
    jax.block_until_ready(total2)
    assert jnp.allclose(total2, total_ref, atol=1e-5, rtol=1e-5), (total2, total_ref)

    # CE-only path (attn_kl disabled)
    (ce_only,) = marginal_penalty_loss(output, targets, None,
                                       kl_weight=1e-4, attn_kl=False, tile_rows=8)
    jax.block_until_ready(ce_only)
    assert jnp.allclose(ce_only, ce_ref, atol=1e-5, rtol=1e-5), (ce_only, ce_ref)

    print("KERNEL_OK")
</pallas_src>

<mosaic_0001>
module attributes {stable_mosaic.version = 11 : i64} {
  func.func @_ce_kl_kernel(%arg0: i32, %arg1: memref<8x16xf32, #tpu.memory_space<vmem>>, %arg2: memref<8x1xi32, #tpu.memory_space<vmem>>, %arg3: memref<8x32xf32, #tpu.memory_space<vmem>>, %arg4: memref<8x32xf32, #tpu.memory_space<vmem>>, %arg5: memref<1x8x128xf32, #tpu.memory_space<vmem>>) attributes {dimension_semantics = [#tpu.dimension_semantics<parallel>], iteration_bounds = array<i64: 4>, scalar_prefetch = 0 : i64, scratch_operands = 0 : i64, tpu.core_type = #tpu.core_type<tc>, window_params = [{transform_indices = @transform_0, window_bounds = array<i64: 8, 16>}, {transform_indices = @transform_1, window_bounds = array<i64: 8, 1>}, {transform_indices = @transform_2, window_bounds = array<i64: 8, 32>}, {transform_indices = @transform_3, window_bounds = array<i64: 8, 32>}, {transform_indices = @transform_4, window_bounds = array<i64: 1, 8, 128>}]} {
    %c8_i32 = arith.constant 8 : i32
    %0 = arith.muli %arg0, %c8_i32 : i32
    %1 = tpu.iota {dimensions = array<i32: 0>} : vector<8x1xi32>
    %2 = vector.broadcast %0 : i32 to vector<8x1xi32>
    %3 = arith.addi %2, %1 : vector<8x1xi32>
    %c30_i32 = arith.constant 30 : i32
    %4 = vector.broadcast %c30_i32 : i32 to vector<8x1xi32>
    %5 = arith.cmpi slt, %3, %4 : vector<8x1xi32>
    %6 = arith.extui %5 : vector<8x1xi1> to vector<8x1xi32>
    %7 = arith.sitofp %6 : vector<8x1xi32> to vector<8x1xf32>
    %c0 = arith.constant 0 : index
    %c0_0 = arith.constant 0 : index
    %8 = vector.load %arg1[%c0, %c0_0] : memref<8x16xf32, #tpu.memory_space<vmem>>, vector<8x16xf32>
    %cst = arith.constant dense<0xFF800000> : vector<8xf32>
    %9 = vector.multi_reduction <maximumf>, %8, %cst [1] : vector<8x16xf32> to vector<8xf32>
    %10 = vector.shape_cast %9 : vector<8xf32> to vector<8x1xf32>
    %11 = vector.broadcast %10 : vector<8x1xf32> to vector<8x16xf32>
    %12 = arith.subf %8, %11 : vector<8x16xf32>
    %13 = math.exp %12 : vector<8x16xf32>
    %cst_1 = arith.constant dense<0.000000e+00> : vector<8xf32>
    %14 = vector.multi_reduction <add>, %13, %cst_1 [1] : vector<8x16xf32> to vector<8xf32>
    %15 = vector.shape_cast %14 : vector<8xf32> to vector<8x1xf32>
    %16 = math.log %15 : vector<8x1xf32>
    %17 = arith.addf %10, %16 : vector<8x1xf32>
    %18 = tpu.iota {dimensions = array<i32: 1>} : vector<8x16xi32>
    %c0_2 = arith.constant 0 : index
    %c0_3 = arith.constant 0 : index
    %19 = vector.load %arg2[%c0_2, %c0_3] : memref<8x1xi32, #tpu.memory_space<vmem>>, vector<8x1xi32>
    %20 = vector.broadcast %19 : vector<8x1xi32> to vector<8x16xi32>
    %21 = arith.cmpi eq, %18, %20 : vector<8x16xi32>
    %22 = arith.extui %21 : vector<8x16xi1> to vector<8x16xi32>
    %23 = arith.sitofp %22 : vector<8x16xi32> to vector<8x16xf32>
    %24 = arith.mulf %8, %23 : vector<8x16xf32>
    %cst_4 = arith.constant dense<0.000000e+00> : vector<8xf32>
    %25 = vector.multi_reduction <add>, %24, %cst_4 [1] : vector<8x16xf32> to vector<8xf32>
    %26 = vector.shape_cast %25 : vector<8xf32> to vector<8x1xf32>
    %27 = arith.subf %17, %26 : vector<8x1xf32>
    %28 = arith.mulf %27, %7 : vector<8x1xf32>
    %29 = vector.shape_cast %28 : vector<8x1xf32> to vector<1x8x1xf32>
    %cst_5 = arith.constant dense<0.000000e+00> : vector<1xf32>
    %30 = vector.multi_reduction <add>, %29, %cst_5 [1, 2] : vector<1x8x1xf32> to vector<1xf32>
    %31 = vector.shape_cast %30 : vector<1xf32> to vector<1x1x1xf32>
    %32 = vector.extract %31[0, 0, 0] : f32 from vector<1x1x1xf32>
    %c0_6 = arith.constant 0 : index
    %c0_7 = arith.constant 0 : index
    %33 = vector.load %arg3[%c0_6, %c0_7] : memref<8x32xf32, #tpu.memory_space<vmem>>, vector<8x32xf32>
    %c0_8 = arith.constant 0 : index
    %c0_9 = arith.constant 0 : index
    %34 = vector.load %arg4[%c0_8, %c0_9] : memref<8x32xf32, #tpu.memory_space<vmem>>, vector<8x32xf32>
    %cst_10 = arith.constant 0.000000e+00 : f32
    %35 = vector.broadcast %cst_10 : f32 to vector<8x32xf32>
    %36 = arith.cmpf ogt, %34, %35 : vector<8x32xf32>
    %cst_11 = arith.constant 1.000000e+00 : f32
    %37 = vector.broadcast %cst_11 : f32 to vector<8x32xf32>
    %38 = arith.select %36, %34, %37 : vector<8x32xi1>, vector<8x32xf32>
    %39 = arith.divf %38, %33 : vector<8x32xf32>
    %40 = math.log %39 : vector<8x32xf32>
    %41 = arith.mulf %38, %40 : vector<8x32xf32>
    %cst_12 = arith.constant 0.000000e+00 : f32
    %42 = vector.broadcast %cst_12 : f32 to vector<8x32xf32>
    %43 = arith.select %36, %41, %42 : vector<8x32xi1>, vector<8x32xf32>
    %44 = vector.shape_cast %43 : vector<8x32xf32> to vector<1x8x32xf32>
    %cst_13 = arith.constant dense<0.000000e+00> : vector<1xf32>
    %45 = vector.multi_reduction <add>, %44, %cst_13 [1, 2] : vector<1x8x32xf32> to vector<1xf32>
    %46 = vector.shape_cast %45 : vector<1xf32> to vector<1x1x1xf32>
    %47 = vector.extract %46[0, 0, 0] : f32 from vector<1x1x1xf32>
    %48 = tpu.iota {dimensions = array<i32: 1>} : vector<1x8x128xi32>
    %c0_i32 = arith.constant 0 : i32
    %49 = vector.broadcast %c0_i32 : i32 to vector<1x8x128xi32>
    %50 = arith.cmpi eq, %48, %49 : vector<1x8x128xi32>
    %c1_i32 = arith.constant 1 : i32
    %51 = vector.broadcast %c1_i32 : i32 to vector<1x8x128xi32>
    %52 = arith.cmpi eq, %48, %51 : vector<1x8x128xi32>
    %cst_14 = arith.constant 0.000000e+00 : f32
    %53 = vector.broadcast %47 : f32 to vector<1x8x128xf32>
    %54 = vector.broadcast %cst_14 : f32 to vector<1x8x128xf32>
    %55 = arith.select %52, %53, %54 : vector<1x8x128xi1>, vector<1x8x128xf32>
    %56 = vector.broadcast %32 : f32 to vector<1x8x128xf32>
    %57 = arith.select %50, %56, %55 : vector<1x8x128xi1>, vector<1x8x128xf32>
    %c0_15 = arith.constant 0 : index
    %c0_16 = arith.constant 0 : index
    %c0_17 = arith.constant 0 : index
    %58 = vector.load %arg5[%c0_15, %c0_16, %c0_17] : memref<1x8x128xf32, #tpu.memory_space<vmem>>, vector<1x8x128xf32>
    tpu.vector_store %arg5[%c0_15, %c0_16, %c0_17], %57 {strides = array<i32>} : memref<1x8x128xf32, #tpu.memory_space<vmem>>, vector<1x8x128xf32>,
    return
  }
  func.func @transform_0(%arg0: i32) -> (i32, i32) {
    %c0_i32 = arith.constant 0 : i32
    %c0_i32_0 = arith.constant 0 : i32
    return %arg0, %c0_i32 : i32, i32
  }
  func.func @transform_1(%arg0: i32) -> (i32, i32) {
    %c0_i32 = arith.constant 0 : i32
    %c0_i32_0 = arith.constant 0 : i32
    return %arg0, %c0_i32 : i32, i32
  }
  func.func @transform_2(%arg0: i32) -> (i32, i32) {
    %c0_i32 = arith.constant 0 : i32
    %c0_i32_0 = arith.constant 0 : i32
    return %arg0, %c0_i32 : i32, i32
  }
  func.func @transform_3(%arg0: i32) -> (i32, i32) {
    %c0_i32 = arith.constant 0 : i32
    %c0_i32_0 = arith.constant 0 : i32
    return %arg0, %c0_i32 : i32, i32
  }
  func.func @transform_4(%arg0: i32) -> (i32, i32, i32) {
    %c0_i32 = arith.constant 0 : i32
    %c0_i32_0 = arith.constant 0 : i32
    %c0_i32_1 = arith.constant 0 : i32
    return %arg0, %c0_i32, %c0_i32_0 : i32, i32, i32
  }
}

</mosaic_0001>

<llo_original>
// kernel: tpu_custom_call.1
$region0: #{tpu_custom_call.1}
  #allocation0 [shape = 'u32[]', space=smem, size = 0x4, offset = 0x4, fixed_abs, tag = 'smem constant byte address 0x4 - core index']
  #allocation1 [shape = 'u32[144,128]{1,0:T(1,128)}', space=vmem, size = 0x12000, scoped, tag = 'internal scratch']
  %s0 = inlined_call_operand.vmem [shape: f32[32,16], index: 0, kind: input, shape index: {}]
  %s1 = inlined_call_operand.vmem [shape: s32[32,1], index: 1, kind: input, shape index: {}]
  %s2 = inlined_call_operand.vmem [shape: f32[32,32], index: 2, kind: input, shape index: {}]
  %s3 = inlined_call_operand.vmem [shape: f32[32,32], index: 3, kind: input, shape index: {}]
  %s4 = inlined_call_operand.hbm [shape: f32[4,8,128], index: 4, kind: output, shape index: {}]
  %s5 = sld [smem:[#allocation0]]
  $region49: #{tpu_custom_call.1} parent=0
    _
  %s7 = ssub.s32 1, %s5
  %s8 = scalar_select 0, %s7, %s5
  $region1: #{tpu_custom_call.1} parent=0
    #allocation2 [shape = 'u8[8192]{0}', space=vmem, size = 0x2000, scoped, tag = 'output window, operand 0']
    #allocation3 [shape = 's32[2]{0}', space=sflag, size = 0x8, scoped, tag = 'scoped memory for tpu_custom_call.1']
    %9 = vsyncpa [#allocation3], 0
    %s10 = scalar_lea.sflag [#allocation3], 1
    %11 = vsyncpa %s10, 0
    loop: start=0, step=1, limit=6
    $region2: #{tpu_custom_call.1} parent=1 // loop_pre_header
      _
    $region3: #{tpu_custom_call.1} parent=1 // loop_header
      %s13 = sphi 0, %s17
      %p14 = scmp.ge.s32.totalorder %s13, 6
      %s23 = sphi 0, %s25
      %s26 = sphi 0, %s23
      %s27 = sphi 0, %s26
      %s43 = sphi 0, %s27
      %s49 = sphi 0, %s51
      %s52 = sphi 0, %s49
      %s53 = sphi 0, %s52
      %s69 = sphi 0, %s53
      %s75 = sphi 0, %s77
      %s78 = sphi 0, %s75
      %s79 = sphi 0, %s78
      %s95 = sphi 0, %s79
      %s101 = sphi 0, %s103
      %s104 = sphi 0, %s101
      %s105 = sphi 0, %s104
      %s121 = sphi 0, %s105
      %s127 = sphi 0, %s129
      %s130 = sphi 0, %s127
      %s131 = sphi 0, %s130
      %s147 = sphi 0, %s131
    $region4: #{tpu_custom_call.1} parent=1 // loop_header_branch
      %16 = sbr.rel (%p14) target = $region8
    $region5: #{tpu_custom_call.1} parent=1 // loop_body
      %s18 = ssub.s32 %s13, 1
      %s19 = ssub.s32 %s13, 2
      %s20 = sadd.s32 %s13, 1
      %s21 = ssub.s32 %s13, %s20
      %p22 = scmp.eq.s32.totalorder %s21, 0
      %s24 = sadd.s32 %s23, 1
      %s25 = scalar_select %p22, %s23, %s24
      %p28 = pneg %p22
      %p29 = scmp.eq.s32.totalorder %s13, 3
      %p30 = por %p28, %p29
      %p31 = scmp.ne.s32.totalorder %s23, %s26
      %p32 = scmp.eq.s32.totalorder %s13, 0
      %p33 = por %p31, %p32
      %p34 = scmp.ne.s32.totalorder %s23, %s26
      %p35 = scmp.eq.s32.totalorder %s18, 3
      %p36 = por %p34, %p35
      %p37 = scmp.ne.s32.totalorder %s26, %s27
      %p38 = scmp.eq.s32.totalorder %s18, 0
      %p39 = por %p37, %p38
      %p40 = scmp.ne.s32.totalorder %s26, %s27
      %p41 = scmp.eq.s32.totalorder %s19, 3
      %p42 = por %p40, %p41
      %p44 = scmp.ne.s32.totalorder %s27, %s43
      %p45 = scmp.eq.s32.totalorder %s19, 0
      %p46 = por %p44, %p45
      %s47 = ssub.s32 %s13, %s20
      %p48 = scmp.eq.s32.totalorder %s47, 0
      %s50 = sadd.s32 %s49, 1
      %s51 = scalar_select %p48, %s49, %s50
      %p54 = pneg %p48
      %p55 = scmp.eq.s32.totalorder %s13, 3
      %p56 = por %p54, %p55
      %p57 = scmp.ne.s32.totalorder %s49, %s52
      %p58 = scmp.eq.s32.totalorder %s13, 0
      %p59 = por %p57, %p58
      %p60 = scmp.ne.s32.totalorder %s49, %s52
      %p61 = scmp.eq.s32.totalorder %s18, 3
      %p62 = por %p60, %p61
      %p63 = scmp.ne.s32.totalorder %s52, %s53
      %p64 = scmp.eq.s32.totalorder %s18, 0
      %p65 = por %p63, %p64
      %p66 = scmp.ne.s32.totalorder %s52, %s53
      %p67 = scmp.eq.s32.totalorder %s19, 3
      %p68 = por %p66, %p67
      %p70 = scmp.ne.s32.totalorder %s53, %s69
      %p71 = scmp.eq.s32.totalorder %s19, 0
      %p72 = por %p70, %p71
      %s73 = ssub.s32 %s13, %s20
      %p74 = scmp.eq.s32.totalorder %s73, 0
      %s76 = sadd.s32 %s75, 1
      %s77 = scalar_select %p74, %s75, %s76
      %p80 = pneg %p74
      %p81 = scmp.eq.s32.totalorder %s13, 3
      %p82 = por %p80, %p81
      %p83 = scmp.ne.s32.totalorder %s75, %s78
      %p84 = scmp.eq.s32.totalorder %s13, 0
      %p85 = por %p83, %p84
      %p86 = scmp.ne.s32.totalorder %s75, %s78
      %p87 = scmp.eq.s32.totalorder %s18, 3
      %p88 = por %p86, %p87
      %p89 = scmp.ne.s32.totalorder %s78, %s79
      %p90 = scmp.eq.s32.totalorder %s18, 0
      %p91 = por %p89, %p90
      %p92 = scmp.ne.s32.totalorder %s78, %s79
      %p93 = scmp.eq.s32.totalorder %s19, 3
      %p94 = por %p92, %p93
      %p96 = scmp.ne.s32.totalorder %s79, %s95
      %p97 = scmp.eq.s32.totalorder %s19, 0
      %p98 = por %p96, %p97
      %s99 = ssub.s32 %s13, %s20
      %p100 = scmp.eq.s32.totalorder %s99, 0
      %s102 = sadd.s32 %s101, 1
      %s103 = scalar_select %p100, %s101, %s102
      %p106 = pneg %p100
      %p107 = scmp.eq.s32.totalorder %s13, 3
      %p108 = por %p106, %p107
      %p109 = scmp.ne.s32.totalorder %s101, %s104
      %p110 = scmp.eq.s32.totalorder %s13, 0
      %p111 = por %p109, %p110
      %p112 = scmp.ne.s32.totalorder %s101, %s104
      %p113 = scmp.eq.s32.totalorder %s18, 3
      %p114 = por %p112, %p113
      %p115 = scmp.ne.s32.totalorder %s104, %s105
      %p116 = scmp.eq.s32.totalorder %s18, 0
      %p117 = por %p115, %p116
      %p118 = scmp.ne.s32.totalorder %s104, %s105
      %p119 = scmp.eq.s32.totalorder %s19, 3
      %p120 = por %p118, %p119
      %p122 = scmp.ne.s32.totalorder %s105, %s121
      %p123 = scmp.eq.s32.totalorder %s19, 0
      %p124 = por %p122, %p123
      %s125 = ssub.s32 %s13, %s20
      %p126 = scmp.eq.s32.totalorder %s125, 0
      %s128 = sadd.s32 %s127, 1
      %s129 = scalar_select %p126, %s127, %s128
      %p132 = pneg %p126
      %p133 = scmp.eq.s32.totalorder %s13, 3
      %p134 = por %p132, %p133
      %p135 = scmp.ne.s32.totalorder %s127, %s130
      %p136 = scmp.eq.s32.totalorder %s13, 0
      %p137 = por %p135, %p136
      %p138 = scmp.ne.s32.totalorder %s127, %s130
      %p139 = scmp.eq.s32.totalorder %s18, 3
      %p140 = por %p138, %p139
      %p141 = scmp.ne.s32.totalorder %s130, %s131
      %p142 = scmp.eq.s32.totalorder %s18, 0
      %p143 = por %p141, %p142
      %p144 = scmp.ne.s32.totalorder %s130, %s131
      %p145 = scmp.eq.s32.totalorder %s19, 3
      %p146 = por %p144, %p145
      %p148 = scmp.ne.s32.totalorder %s131, %s147
      %p149 = scmp.eq.s32.totalorder %s19, 0
      %p150 = por %p148, %p149
      %p151 = scmp.le.s32.totalorder 1, %s13
      %p152 = scmp.lt.s32.totalorder %s13, 5
      %p153 = pnand %p151, %p152
      %p154 = pneg %p153
      // Predicated region
      $region9: #{tpu_custom_call.1} parent=5 // pred_check
        _
      $region10: #{tpu_custom_call.1} parent=5 // pred_check_branch
        %156 = sbr.rel (%p153) target = $region12
      $region11: #{tpu_custom_call.1} parent=5 // pred_region
        %s157 = ssub.s32 %s13, 1
      $region12: #{tpu_custom_call.1} parent=5 // pred_fallthru
        _
      %p158 = scmp.lt.s32.totalorder %s13, 4
      // Predicated region
      $region13: #{tpu_custom_call.1} parent=5 // pred_check
        %p159 = pneg %p158
      $region14: #{tpu_custom_call.1} parent=5 // pred_check_branch
        %161 = sbr.rel (%p159) target = $region16
      $region15: #{tpu_custom_call.1} parent=5 // pred_region
        // Predicated region
        $region17: #{tpu_custom_call.1} parent=15 // pred_check
          %p162 = pneg %p33
        $region18: #{tpu_custom_call.1} parent=15 // pred_check_branch
          %164 = sbr.rel (%p162) target = $region20
        $region19: #{tpu_custom_call.1} parent=15 // pred_region
          %p165 = scmp.lt.s32.totalorder %s13, 3
          %s166 = scalar_select %p165, %s13, 3
          %s167 = smul.addr %s166, 8
          %s168 = scalar_lea.vmem %s0, %s167
        $region20: #{tpu_custom_call.1} parent=15 // pred_fallthru
          _
        // Predicated region
        $region21: #{tpu_custom_call.1} parent=15 // pred_check
          %p169 = pneg %p59
        $region22: #{tpu_custom_call.1} parent=15 // pred_check_branch
          %171 = sbr.rel (%p169) target = $region24
        $region23: #{tpu_custom_call.1} parent=15 // pred_region
          %p172 = scmp.lt.s32.totalorder %s13, 3
          %s173 = scalar_select %p172, %s13, 3
          %s174 = smul.addr %s173, 8
          %s175 = scalar_lea.vmem %s1, %s174
        $region24: #{tpu_custom_call.1} parent=15 // pred_fallthru
          _
        // Predicated region
        $region25: #{tpu_custom_call.1} parent=15 // pred_check
          %p176 = pneg %p85
        $region26: #{tpu_custom_call.1} parent=15 // pred_check_branch
          %178 = sbr.rel (%p176) target = $region28
        $region27: #{tpu_custom_call.1} parent=15 // pred_region
          %p179 = scmp.lt.s32.totalorder %s13, 3
          %s180 = scalar_select %p179, %s13, 3
          %s181 = smul.addr %s180, 8
          %s182 = scalar_lea.vmem %s2, %s181
        $region28: #{tpu_custom_call.1} parent=15 // pred_fallthru
          _
        // Predicated region
        $region29: #{tpu_custom_call.1} parent=15 // pred_check
          %p183 = pneg %p111
        $region30: #{tpu_custom_call.1} parent=15 // pred_check_branch
          %185 = sbr.rel (%p183) target = $region32
        $region31: #{tpu_custom_call.1} parent=15 // pred_region
          %p186 = scmp.lt.s32.totalorder %s13, 3
          %s187 = scalar_select %p186, %s13, 3
          %s188 = smul.addr %s187, 8
          %s189 = scalar_lea.vmem %s3, %s188
        $region32: #{tpu_custom_call.1} parent=15 // pred_fallthru
          _
      $region16: #{tpu_custom_call.1} parent=5 // pred_fallthru
        _
      %p190 = scmp.le.s32.totalorder 1, %s13
      %p191 = scmp.lt.s32.totalorder %s13, 5
      %p192 = pnand %p190, %p191
      %p193 = pneg %p192
      // Predicated region
      $region33: #{tpu_custom_call.1} parent=5 // pred_check
        _
      $region34: #{tpu_custom_call.1} parent=5 // pred_check_branch
        %195 = sbr.rel (%p192) target = $region36
      $region35: #{tpu_custom_call.1} parent=5 // pred_region
        %s196 = ssub.s32 %s13, 1
        %p197 = scmp.lt.s32.totalorder %s18, 3
        %s198 = scalar_select %p197, %s18, 3
        %s199 = smul.addr %s198, 8
        %s200 = scalar_lea.vmem %s0, %s199
        %p201 = pneg %p39
        %p202 = pneg %p36
        %p203 = scmp.lt.s32.totalorder %s18, 3
        %s204 = scalar_select %p203, %s18, 3
        %s205 = smul.addr %s204, 8
        %s206 = scalar_lea.vmem %s1, %s205
        %p207 = pneg %p65
        %p208 = pneg %p62
        %p209 = scmp.lt.s32.totalorder %s18, 3
        %s210 = scalar_select %p209, %s18, 3
        %s211 = smul.addr %s210, 8
        %s212 = scalar_lea.vmem %s2, %s211
        %p213 = pneg %p91
        %p214 = pneg %p88
        %p215 = scmp.lt.s32.totalorder %s18, 3
        %s216 = scalar_select %p215, %s18, 3
        %s217 = smul.addr %s216, 8
        %s218 = scalar_lea.vmem %s3, %s217
        %p219 = pneg %p117
        %p220 = pneg %p114
        %p221 = pneg %p143
        %p222 = pneg %p140
        %s223 = sand.u32 %s130, 1
        %s224 = scalar_lea.sflag [#allocation3], %s223
        %s225 = sand.u32 %s130, 1
        %s226 = smul.addr %s225, 8
        %s227 = scalar_lea.vmem [#allocation2], %s226
        %p228 = scmp.lt.s32.totalorder %s18, 3
        %s229 = scalar_select %p228, %s18, 3
        %s230 = smul.addr %s229, 8
        %s231 = scalar_lea.vmem %s0, %s230
        %p232 = scmp.lt.s32.totalorder %s18, 3
        %s233 = scalar_select %p232, %s18, 3
        %s234 = smul.addr %s233, 8
        %s235 = scalar_lea.vmem %s1, %s234
        %p236 = scmp.lt.s32.totalorder %s18, 3
        %s237 = scalar_select %p236, %s18, 3
        %s238 = smul.addr %s237, 8
        %s239 = scalar_lea.vmem %s2, %s238
        %p240 = scmp.lt.s32.totalorder %s18, 3
        %s241 = scalar_select %p240, %s18, 3
        %s242 = smul.addr %s241, 8
        %s243 = scalar_lea.vmem %s3, %s242
        %s244 = smul.u32 %s18, 8
        %v245 = vlaneseq
        %v246 = vshrl.u32 %v245, 7
        %v247 = vstv %s244
        %v248 = vadd.s32 %v247, %v246
        %vm249 = vcmp.lt.s32.totalorder %v248, 30
        %v250 = vsel %vm249, 1, 0
        %v251 = vcvt.s32.f32 %v250
        %v252 = vld [vmem:[%s231] sm:$0xff]
        %vm253 = vcmask 130048
        %v254 = vsel %vm253, %v252, -inf
        %255 = vmax.xlane.f32.xlu0 %v254
        %v256 = vpop.xlane.xlu0 %255
        %v257 = vsub.f32 %v252, %v256
        %v258 = vmul.f32 %v257, 1.442695
        %v259 = vpow.pop %v258
        %v260 = vsel %vm253, %v259, 0.0
        %261 = vadd.xlane.f32.xlu0 %v260
        %v262 = vpop.xlane.xlu0 %261
        %v263 = vlog2.pop %v262
        %v264 = vmul.f32 %v263, 0.6931472
        %v265 = vadd.f32 %v256, %v264
        %v266 = vlaneseq
        %v267 = vand.u32 %v266, 127
        %v268 = vld [vmem:[%s235] sm:$0xff]
        %269 = vset.pattern.permute.xlu0 0
        %270 = vperm.xlu0 %269, %v268
        %v271 = vpop.permute.xlu0 %270
        %vm272 = vcmp.eq.s32.totalorder %v267, %v271
        %v273 = vsel %vm272, 1, 0
        %v274 = vcvt.s32.f32 %v273
        %v275 = vmul.f32 %v252, %v274
        %v276 = vsel %vm253, %v275, 0.0
        %277 = vadd.xlane.f32.xlu0 %v276
        %v278 = vpop.xlane.xlu0 %277
        %v279 = vsub.f32 %v265, %v278
        %v280 = vmul.f32 %v279, %v251
        %vm281 = vcmask 7168
        %v282 = vsel %vm281, %v280, 0.0
        %283 = vadd.xlane.f32.xlu0 %v282
        %v284 = vpop.xlane.xlu0 %283
        %v285 = vrot.slane %v284, 4
        %v286 = vadd.f32 %v284, %v285
        %v287 = vrot.slane %v286, 2
        %v288 = vadd.f32 %v286, %v287
        %v289 = vrot.slane %v288, 1
        %v290 = vadd.f32 %v288, %v289
        %s291 = vtos %v290
        %v292 = vld [vmem:[%s239] sm:$0xff]
        %v293 = vld [vmem:[%s243] sm:$0xff]
        %vm294 = vcmp.gt.f32.partialorder %v293, 0.0
        %v295 = vsel %vm294, %v293, 1.0
        %v296 = vrcp.pop %v292
        %v297 = vmul.f32 %v295, %v296
        %v298 = vlog2.pop %v297
        %v299 = vmul.f32 %v298, 0.6931472
        %v300 = vmul.f32 %v295, %v299
        %v301 = vsel %vm294, %v300, 0.0
        %vm302 = vcmask 261120
        %v303 = vsel %vm302, %v301, 0.0
        %304 = vadd.xlane.f32.xlu0 %v303
        %v305 = vpop.xlane.xlu0 %304
        %v306 = vrot.slane %v305, 4
        %v307 = vadd.f32 %v305, %v306
        %v308 = vrot.slane %v307, 2
        %v309 = vadd.f32 %v307, %v308
        %v310 = vrot.slane %v309, 1
        %v311 = vadd.f32 %v309, %v310
        %s312 = vtos %v311
        %vm313 = vcmp.eq.s32.totalorder %v246, 0
        %vm314 = vcmp.eq.s32.totalorder %v246, 1
        %v315 = vstv %s312
        %v316 = vsel %vm314, %v315, 0.0
        %v317 = vstv %s291
        %v318 = vsel %vm313, %v317, %v316
        %319 = vst [vmem:[%s227] sm:$0xff] %v318
        %s320 = sand.u32 %s130, 1
        %s321 = scalar_lea.sflag [#allocation3], %s320
        %s322 = sand.u32 %s130, 1
        %s323 = smul.addr %s322, 8
        %s324 = scalar_lea.vmem [#allocation2], %s323
        // Predicated region
        $region37: #{tpu_custom_call.1} parent=35 // pred_check
          %p325 = pneg %p140
        $region38: #{tpu_custom_call.1} parent=35 // pred_check_branch
          %327 = sbr.rel (%p325) target = $region40
        $region39: #{tpu_custom_call.1} parent=35 // pred_region
          %s329 = ssub.s32 128, 128
          %330 = vsyncadd %s321, %s329
          %s331 = smul.addr %s18, 128
          %s332 = scalar_lea.hbm %s4, %s331
          %s334 = sshll.u32 %s324, 4
          %s335 = int_to_ptr.vmem [resolvable:$true] %s334
          %337 = dma.vmem_to_hbm [thread:$0]  %s335, 128, %s332, %s321
        $region40: #{tpu_custom_call.1} parent=35 // pred_fallthru
          _
      $region36: #{tpu_custom_call.1} parent=5 // pred_fallthru
        _
      %p338 = scmp.le.s32.totalorder 2, %s13
      // Predicated region
      $region41: #{tpu_custom_call.1} parent=5 // pred_check
        %p339 = pneg %p338
      $region42: #{tpu_custom_call.1} parent=5 // pred_check_branch
        %341 = sbr.rel (%p339) target = $region44
      $region43: #{tpu_custom_call.1} parent=5 // pred_region
        %s342 = ssub.s32 %s13, 2
        // Predicated region
        $region45: #{tpu_custom_call.1} parent=43 // pred_check
          %p343 = pneg %p146
        $region46: #{tpu_custom_call.1} parent=43 // pred_check_branch
          %345 = sbr.rel (%p343) target = $region48
        $region47: #{tpu_custom_call.1} parent=43 // pred_region
          %s346 = sand.u32 %s131, 1
          %s347 = scalar_lea.sflag [#allocation3], %s346
          %s348 = sand.u32 %s131, 1
          %s349 = smul.addr %s348, 8
          %s350 = scalar_lea.vmem [#allocation2], %s349
          %351 = dma.done %s347, 128
        $region48: #{tpu_custom_call.1} parent=43 // pred_fallthru
          _
      $region44: #{tpu_custom_call.1} parent=5 // pred_fallthru
        _
    $region6: #{tpu_custom_call.1} parent=1 // loop_footer
      %s17 = sadd.s32 1, %s13
    $region7: #{tpu_custom_call.1} parent=1 // loop_footer_branch
      %12 = sbr.rel target = $region3
    $region8: #{tpu_custom_call.1} parent=1 // loop_exit
      _
    %352 = vsyncpa [#allocation3], 1
    %s353 = scalar_lea.sflag [#allocation3], 1
    %354 = vsyncpa %s353, 1

</llo_original>
